<compile_context>
chip_gen: v5e
topology: v5e:2x2
jax: 0.10.0
libtpu: 0.0.40
codegen_flags: <defaults>
</compile_context>

<pallas_src>
import functools

import jax
import jax.numpy as jnp
from jax import lax
from jax.experimental import pallas as pl
from jax.experimental.pallas import tpu as pltpu


def _round_up(x, m):
    return (x + m - 1) // m * m


def _vmem_budget_bytes():
    """Per-generation VMEM budget derived from the physical capacity."""
    try:
        phys = int(pltpu.get_tpu_info().vmem_capacity_bytes)
    except Exception:
        phys = 64 * 1024 * 1024          # conservative fallback (v7x per-core size)
    # ~75% of physical (=> ~96 MiB on v5e/v6e's 128 MiB, ~48 MiB on v7x's 64 MiB),
    # always leaving >=16 MiB headroom for Mosaic internal scratch.
    return max(32 * 1024 * 1024, min(int(phys * 0.75), phys - 16 * 1024 * 1024))


def _pick_time_chunk(T, bp, gp, xg_itemsize, whh_bytes, state_bytes, budget):
    """Largest time chunk whose double-buffered xg stream fits the VMEM budget."""
    fixed = 2 * whh_bytes + state_bytes + 64 * 1024   # weights double-buffered + misc
    stream_budget = int(budget * 0.85) - fixed
    per_step = 2 * bp * gp * xg_itemsize              # 2 = double-buffered xg blocks
    tc = max(1, stream_budget // per_step)
    return int(max(1, min(T, tc, 2048)))


def _lstm_disc_kernel(xg_ref, w_hh_ref, w_fc_ref, b_fc_ref, out_ref, h_ref, c_ref,
                      *, tc, bp, hidden, gp, seq_len, unroll):
    """One grid step == one time chunk of the LSTM recurrence.

    xg_ref   : (tc*bp, gp)  pre-projected gate inputs x@W_ih^T + b, dense [i|f|g|o]
    w_hh_ref : (H, gp)      hidden->gates weights, dense gate packing
    w_fc_ref : (1, H)       final linear weight (f32)
    b_fc_ref : (1, 1)       final linear bias (f32)
    out_ref  : (bp, 1)      sigmoid(fc(h_T)); written on the last grid step only
    h_ref/c_ref : (bp, H)   f32 recurrent state carried across time chunks
    """
    t_id = pl.program_id(0)

    @pl.when(t_id == 0)
    def _init():
        h_ref[...] = jnp.zeros_like(h_ref)
        c_ref[...] = jnp.zeros_like(c_ref)

    mm_dtype = w_hh_ref.dtype
    w_hh = w_hh_ref[...]                       # resident weights: load once per chunk
    need_mask = (seq_len % tc) != 0            # static: only last chunk has padded steps

    # Lane-index mask (hoisted out of the loop): cell gate g (tanh) lives in lanes
    # [2H, 3H) of the dense [i|f|g|o] packing; everything else is a sigmoid lane.
    lane = lax.broadcasted_iota(jnp.int32, (bp, gp), 1)
    is_g = (lane >= 2 * hidden) & (lane < 3 * hidden)

    def step(t, carry):
        h, c, h_mm = carry                                            # f32, f32, mm_dtype
        row = pl.multiple_of(t * bp, 8)
        gates = xg_ref[pl.ds(row, bp), :] + jnp.dot(
            h_mm, w_hh, preferred_element_type=jnp.float32)           # (bp, gp) f32

        # Single-EUP nonlinearity over the packed gates:
        #   sigmoid(x) = 0.5 * tanh(0.5 * x) + 0.5  (exact identity)
        pre = jnp.where(is_g, gates, 0.5 * gates)
        th = jnp.tanh(pre)
        act = jnp.where(is_g, th, 0.5 * th + 0.5)                     # (bp, gp)

        i_g = act[:, 0 * hidden:1 * hidden]                           # (bp, H) each
        f_g = act[:, 1 * hidden:2 * hidden]
        g_g = act[:, 2 * hidden:3 * hidden]
        o_g = act[:, 3 * hidden:4 * hidden]

        c_new = f_g * c + i_g * g_g
        h_new = o_g * jnp.tanh(c_new)

        if need_mask:                                                  # ragged-T tail guard
            valid = (t_id * tc + t) < seq_len
            h_new = jnp.where(valid, h_new, h)
            c_new = jnp.where(valid, c_new, c)

        # Produce the matmul-dtype copy at the tail so the cast overlaps the
        # elementwise epilogue instead of sitting on the next step's matmul push.
        return h_new, c_new, h_new.astype(mm_dtype)

    h0 = h_ref[...]
    c0 = c_ref[...]
    h, c, _ = lax.fori_loop(0, tc, step, (h0, c0, h0.astype(mm_dtype)),
                            unroll=unroll)
    h_ref[...] = h
    c_ref[...] = c

    @pl.when(t_id == pl.num_programs(0) - 1)
    def _finalize():
        # (bp,H)x(H,1) would be a 1-column MXU matmul -> VPU multiply + lane reduce.
        logits = jnp.sum(h * w_fc_ref[...], axis=-1, keepdims=True) + b_fc_ref[...]
        out_ref[...] = 0.5 * jnp.tanh(0.5 * logits) + 0.5             # sigmoid via tanh


def discriminator_forward(x, params, *, time_chunk=None,
                          compute_dtype=jnp.float32, unroll=8):
    """x: (B, T, D) float32 (batch_first, like the PyTorch module). Returns (B, 1)."""
    B, T, D = x.shape
    H = params["w_hh"].shape[1]
    bp = _round_up(B, 8)                      # sublane-aligned batch
    gp = _round_up(4 * H, 128)                # dense-packed gate width, lane-aligned

    budget = _vmem_budget_bytes()
    xg_itemsize = jnp.dtype(compute_dtype).itemsize
    whh_bytes = H * gp * jnp.dtype(compute_dtype).itemsize
    state_bytes = 2 * bp * _round_up(H, 128) * 4
    if time_chunk is None:
        tc = _pick_time_chunk(T, bp, gp, xg_itemsize, whh_bytes, state_bytes, budget)
    else:
        tc = max(1, min(int(time_chunk), T))
    nt = (T + tc - 1) // tc
    t_pad = nt * tc                            # ragged T: pad + mask, never collapse tc

    # --- wrapper-side input projection + layout (lane-dense xg) -----------------
    # PyTorch gate order along the 4H axis is [i, f, g, o]; w_ih is (4H, D).
    w_ih_t = params["w_ih"].T.astype(jnp.float32)                          # (D, 4H)
    bias = (params["b_ih"] + params["b_hh"]).astype(jnp.float32)           # (4H,)
    x_tm = jnp.transpose(x, (1, 0, 2)).astype(jnp.float32)                 # (T, B, D)
    xg = jnp.einsum("tbd,dg->tbg", x_tm, w_ih_t) + bias                    # (T, B, 4H)
    xg = jnp.pad(xg, ((0, t_pad - T), (0, bp - B), (0, gp - 4 * H)))       # (t_pad,bp,gp)
    xg = xg.reshape(t_pad * bp, gp).astype(compute_dtype)

    w_hh = jnp.pad(params["w_hh"].T,
                   ((0, 0), (0, gp - 4 * H))).astype(compute_dtype)        # (H, gp)
    w_fc = params["w_fc"].astype(jnp.float32)                              # (1, H)
    b_fc = params["b_fc"].reshape(1, 1).astype(jnp.float32)                # (1, 1)

    kernel = functools.partial(_lstm_disc_kernel, tc=tc, bp=bp, hidden=H, gp=gp,
                               seq_len=T, unroll=min(unroll, tc))

    out = pl.pallas_call(
        kernel,
        out_shape=jax.ShapeDtypeStruct((bp, 1), jnp.float32),
        grid_spec=pltpu.PrefetchScalarGridSpec(
            num_scalar_prefetch=0,
            grid=(nt,),
            in_specs=[
                pl.BlockSpec((tc * bp, gp), lambda t: (t, 0)),   # streamed xg chunks
                pl.BlockSpec((H, gp), lambda t: (0, 0)),         # resident W_hh
                pl.BlockSpec((1, H), lambda t: (0, 0)),          # resident w_fc
                pl.BlockSpec((1, 1), lambda t: (0, 0)),          # resident b_fc
            ],
            out_specs=pl.BlockSpec((bp, 1), lambda t: (0, 0)),
            scratch_shapes=[
                pltpu.VMEM((bp, H), jnp.float32),                # h state (f32)
                pltpu.VMEM((bp, H), jnp.float32),                # c state (f32)
            ],
        ),
        compiler_params=pltpu.CompilerParams(
            dimension_semantics=("arbitrary",),                  # time is serial
            vmem_limit_bytes=budget,
        ),
    )(xg, w_hh, w_fc, b_fc)

    return out[:B]                                               # drop padded batch rows


def _reference_forward(x, params):
    """Pure-JAX reference replicating torch.nn.LSTM (1 layer) + Linear + sigmoid."""
    B, T, D = x.shape
    H = params["w_hh"].shape[1]
    h = jnp.zeros((B, H), jnp.float32)
    c = jnp.zeros((B, H), jnp.float32)
    b = params["b_ih"] + params["b_hh"]
    for t in range(T):
        gates = x[:, t, :] @ params["w_ih"].T + h @ params["w_hh"].T + b
        i_g = jax.nn.sigmoid(gates[:, 0 * H:1 * H])
        f_g = jax.nn.sigmoid(gates[:, 1 * H:2 * H])
        g_g = jnp.tanh(gates[:, 2 * H:3 * H])
        o_g = jax.nn.sigmoid(gates[:, 3 * H:4 * H])
        c = f_g * c + i_g * g_g
        h = o_g * jnp.tanh(c)
    return jax.nn.sigmoid(h @ params["w_fc"].T + params["b_fc"][None, :])


def init_params(key, input_dim, hidden_dim):
    """Deterministic init matching PyTorch shapes (uniform(-1/sqrt(H), 1/sqrt(H)))."""
    k = 1.0 / jnp.sqrt(hidden_dim)
    keys = jax.random.split(key, 6)
    return {
        "w_ih": jax.random.uniform(keys[0], (4 * hidden_dim, input_dim),
                                   jnp.float32, -k, k),
        "w_hh": jax.random.uniform(keys[1], (4 * hidden_dim, hidden_dim),
                                   jnp.float32, -k, k),
        "b_ih": jax.random.uniform(keys[2], (4 * hidden_dim,), jnp.float32, -k, k),
        "b_hh": jax.random.uniform(keys[3], (4 * hidden_dim,), jnp.float32, -k, k),
        "w_fc": jax.random.uniform(keys[4], (1, hidden_dim), jnp.float32, -k, k),
        "b_fc": jax.random.uniform(keys[5], (1,), jnp.float32, -k, k),
    }


if __name__ == "__main__":
    B, T, D, H = 2, 8, 4, 32   # batch, seq len, input_dim, hidden_dim

    key = jax.random.PRNGKey(0)
    k_params, k_x = jax.random.split(key)
    params = init_params(k_params, D, H)
    x = jax.random.normal(k_x, (B, T, D), jnp.float32)

    ref = _reference_forward(x, params)

    # Default path: budget-driven tc (=T here -> single chunk), f32 matmuls.
    out_f32 = jax.block_until_ready(discriminator_forward(x, params))
    assert out_f32.shape == (B, 1)
    assert jnp.allclose(out_f32, ref, atol=1e-4, rtol=1e-4), (out_f32, ref)

    # Multi-chunk + ragged tail (T=8, tc=3 -> 3 chunks, last chunk has masked steps):
    # exercises cross-chunk h/c carry and the padded-timestep guard.
    out_rag = jax.block_until_ready(
        discriminator_forward(x, params, time_chunk=3))
    assert jnp.allclose(out_rag, ref, atol=1e-4, rtol=1e-4), (out_rag, ref)

    # bf16-matmul path (MXU inputs bf16; gate math / state stay f32 -> loose tol).
    # NOTE: h is re-quantized to bf16 each step, so error compounds with T;
    # validate at the target sequence length before shipping this path.
    out_bf16 = jax.block_until_ready(
        discriminator_forward(x, params, compute_dtype=jnp.bfloat16))
    assert out_bf16.shape == (B, 1)
    assert jnp.allclose(out_bf16, ref, atol=5e-2, rtol=5e-2), (out_bf16, ref)

    print("KERNEL_OK")
</pallas_src>

<mosaic_0001>
module attributes {stable_mosaic.version = 11 : i64} {
  func.func @_lstm_disc_kernel(%arg0: i32, %arg1: memref<64x128xf32, #tpu.memory_space<vmem>>, %arg2: memref<32x128xf32, #tpu.memory_space<vmem>>, %arg3: memref<1x32xf32, #tpu.memory_space<vmem>>, %arg4: memref<1x1xf32, #tpu.memory_space<vmem>>, %arg5: memref<8x1xf32, #tpu.memory_space<vmem>>, %arg6: memref<8x32xf32, #tpu.memory_space<vmem>>, %arg7: memref<8x32xf32, #tpu.memory_space<vmem>>) attributes {dimension_semantics = [#tpu.dimension_semantics<arbitrary>], iteration_bounds = array<i64: 1>, scalar_prefetch = 0 : i64, scratch_operands = 2 : i64, tpu.core_type = #tpu.core_type<tc>, window_params = [{transform_indices = @transform_0, window_bounds = array<i64: 64, 128>}, {pipeline_mode = #tpu.pipeline_mode<synchronous>, transform_indices = @transform_1, window_bounds = array<i64: 32, 128>}, {pipeline_mode = #tpu.pipeline_mode<synchronous>, transform_indices = @transform_2, window_bounds = array<i64: 1, 32>}, {pipeline_mode = #tpu.pipeline_mode<synchronous>, transform_indices = @transform_3, window_bounds = array<i64: 1, 1>}, {pipeline_mode = #tpu.pipeline_mode<synchronous>, transform_indices = @transform_4, window_bounds = array<i64: 8, 1>}]} {
    %c0_i32 = arith.constant 0 : i32
    %0 = arith.cmpi eq, %arg0, %c0_i32 : i32
    %1 = arith.extui %0 : i1 to i32
    %c0_i32_0 = arith.constant 0 : i32
    %2 = arith.cmpi ne, %1, %c0_i32_0 : i32
    scf.if %2 {
      %cst_60 = arith.constant 0.000000e+00 : f32
      %209 = vector.broadcast %cst_60 : f32 to vector<8x32xf32>
      %c0_61 = arith.constant 0 : index
      %c0_62 = arith.constant 0 : index
      %210 = vector.load %arg6[%c0_61, %c0_62] : memref<8x32xf32, #tpu.memory_space<vmem>>, vector<8x32xf32>
      tpu.vector_store %arg6[%c0_61, %c0_62], %209 {strides = array<i32>} : memref<8x32xf32, #tpu.memory_space<vmem>>, vector<8x32xf32>,
      %cst_63 = arith.constant 0.000000e+00 : f32
      %211 = vector.broadcast %cst_63 : f32 to vector<8x32xf32>
      %c0_64 = arith.constant 0 : index
      %c0_65 = arith.constant 0 : index
      %212 = vector.load %arg7[%c0_64, %c0_65] : memref<8x32xf32, #tpu.memory_space<vmem>>, vector<8x32xf32>
      tpu.vector_store %arg7[%c0_64, %c0_65], %211 {strides = array<i32>} : memref<8x32xf32, #tpu.memory_space<vmem>>, vector<8x32xf32>,
    } else {
    }
    %c0 = arith.constant 0 : index
    %c0_1 = arith.constant 0 : index
    %3 = vector.load %arg2[%c0, %c0_1] : memref<32x128xf32, #tpu.memory_space<vmem>>, vector<32x128xf32>
    %4 = tpu.iota {dimensions = array<i32: 1>} : vector<8x128xi32>
    %c64_i32 = arith.constant 64 : i32
    %5 = vector.broadcast %c64_i32 : i32 to vector<8x128xi32>
    %6 = arith.cmpi sge, %4, %5 : vector<8x128xi32>
    %c96_i32 = arith.constant 96 : i32
    %7 = vector.broadcast %c96_i32 : i32 to vector<8x128xi32>
    %8 = arith.cmpi slt, %4, %7 : vector<8x128xi32>
    %9 = arith.andi %6, %8 : vector<8x128xi1>
    %c0_2 = arith.constant 0 : index
    %c0_3 = arith.constant 0 : index
    %10 = vector.load %arg6[%c0_2, %c0_3] : memref<8x32xf32, #tpu.memory_space<vmem>>, vector<8x32xf32>
    %c0_4 = arith.constant 0 : index
    %c0_5 = arith.constant 0 : index
    %11 = vector.load %arg7[%c0_4, %c0_5] : memref<8x32xf32, #tpu.memory_space<vmem>>, vector<8x32xf32>
    %c0_i32_6 = arith.constant 0 : i32
    %c8_i32 = arith.constant 8 : i32
    %12 = arith.muli %c0_i32_6, %c8_i32 : i32
    %13 = tpu.assume_multiple %12, 8 : i32
    %14 = arith.index_cast %13 : i32 to index
    %c0_7 = arith.constant 0 : index
    %15 = vector.load %arg1[%14, %c0_7] : memref<64x128xf32, #tpu.memory_space<vmem>>, vector<8x128xf32>
    %cst = arith.constant dense<0.000000e+00> : vector<8x128xf32>
    %16 = tpu.matmul %10, %3, %cst {dimension_numbers = #tpu.dot_dimension_numbers<[1], [0], [0], [1], [0, 0, 1, 1], [], []>} : vector<8x32xf32>, vector<32x128xf32>, vector<8x128xf32> -> vector<8x128xf32>
    %17 = arith.addf %15, %16 : vector<8x128xf32>
    %cst_8 = arith.constant 5.000000e-01 : f32
    %18 = vector.broadcast %cst_8 : f32 to vector<8x128xf32>
    %19 = arith.mulf %18, %17 : vector<8x128xf32>
    %20 = arith.select %9, %17, %19 : vector<8x128xi1>, vector<8x128xf32>
    %21 = math.tanh %20 : vector<8x128xf32>
    %cst_9 = arith.constant 5.000000e-01 : f32
    %22 = vector.broadcast %cst_9 : f32 to vector<8x128xf32>
    %23 = arith.mulf %22, %21 : vector<8x128xf32>
    %cst_10 = arith.constant 5.000000e-01 : f32
    %24 = vector.broadcast %cst_10 : f32 to vector<8x128xf32>
    %25 = arith.addf %23, %24 : vector<8x128xf32>
    %26 = arith.select %9, %21, %25 : vector<8x128xi1>, vector<8x128xf32>
    %27 = vector.extract_strided_slice %26 {offsets = [0, 0], sizes = [8, 32], strides = [1, 1]} : vector<8x128xf32> to vector<8x32xf32>
    %28 = vector.extract_strided_slice %26 {offsets = [0, 32], sizes = [8, 32], strides = [1, 1]} : vector<8x128xf32> to vector<8x32xf32>
    %29 = vector.extract_strided_slice %26 {offsets = [0, 64], sizes = [8, 32], strides = [1, 1]} : vector<8x128xf32> to vector<8x32xf32>
    %30 = vector.extract_strided_slice %26 {offsets = [0, 96], sizes = [8, 32], strides = [1, 1]} : vector<8x128xf32> to vector<8x32xf32>
    %31 = arith.mulf %28, %11 : vector<8x32xf32>
    %32 = arith.mulf %27, %29 : vector<8x32xf32>
    %33 = arith.addf %31, %32 : vector<8x32xf32>
    %34 = math.tanh %33 : vector<8x32xf32>
    %35 = arith.mulf %30, %34 : vector<8x32xf32>
    %c1_i32 = arith.constant 1 : i32
    %c8_i32_11 = arith.constant 8 : i32
    %36 = arith.muli %c1_i32, %c8_i32_11 : i32
    %37 = tpu.assume_multiple %36, 8 : i32
    %38 = arith.index_cast %37 : i32 to index
    %c0_12 = arith.constant 0 : index
    %39 = vector.load %arg1[%38, %c0_12] : memref<64x128xf32, #tpu.memory_space<vmem>>, vector<8x128xf32>
    %cst_13 = arith.constant dense<0.000000e+00> : vector<8x128xf32>
    %40 = tpu.matmul %35, %3, %cst_13 {dimension_numbers = #tpu.dot_dimension_numbers<[1], [0], [0], [1], [0, 0, 1, 1], [], []>} : vector<8x32xf32>, vector<32x128xf32>, vector<8x128xf32> -> vector<8x128xf32>
    %41 = arith.addf %39, %40 : vector<8x128xf32>
    %cst_14 = arith.constant 5.000000e-01 : f32
    %42 = vector.broadcast %cst_14 : f32 to vector<8x128xf32>
    %43 = arith.mulf %42, %41 : vector<8x128xf32>
    %44 = arith.select %9, %41, %43 : vector<8x128xi1>, vector<8x128xf32>
    %45 = math.tanh %44 : vector<8x128xf32>
    %cst_15 = arith.constant 5.000000e-01 : f32
    %46 = vector.broadcast %cst_15 : f32 to vector<8x128xf32>
    %47 = arith.mulf %46, %45 : vector<8x128xf32>
    %cst_16 = arith.constant 5.000000e-01 : f32
    %48 = vector.broadcast %cst_16 : f32 to vector<8x128xf32>
    %49 = arith.addf %47, %48 : vector<8x128xf32>
    %50 = arith.select %9, %45, %49 : vector<8x128xi1>, vector<8x128xf32>
    %51 = vector.extract_strided_slice %50 {offsets = [0, 0], sizes = [8, 32], strides = [1, 1]} : vector<8x128xf32> to vector<8x32xf32>
    %52 = vector.extract_strided_slice %50 {offsets = [0, 32], sizes = [8, 32], strides = [1, 1]} : vector<8x128xf32> to vector<8x32xf32>
    %53 = vector.extract_strided_slice %50 {offsets = [0, 64], sizes = [8, 32], strides = [1, 1]} : vector<8x128xf32> to vector<8x32xf32>
    %54 = vector.extract_strided_slice %50 {offsets = [0, 96], sizes = [8, 32], strides = [1, 1]} : vector<8x128xf32> to vector<8x32xf32>
    %55 = arith.mulf %52, %33 : vector<8x32xf32>
    %56 = arith.mulf %51, %53 : vector<8x32xf32>
    %57 = arith.addf %55, %56 : vector<8x32xf32>
    %58 = math.tanh %57 : vector<8x32xf32>
    %59 = arith.mulf %54, %58 : vector<8x32xf32>
    %c2_i32 = arith.constant 2 : i32
    %c8_i32_17 = arith.constant 8 : i32
    %60 = arith.muli %c2_i32, %c8_i32_17 : i32
    %61 = tpu.assume_multiple %60, 8 : i32
    %62 = arith.index_cast %61 : i32 to index
    %c0_18 = arith.constant 0 : index
    %63 = vector.load %arg1[%62, %c0_18] : memref<64x128xf32, #tpu.memory_space<vmem>>, vector<8x128xf32>
    %cst_19 = arith.constant dense<0.000000e+00> : vector<8x128xf32>
    %64 = tpu.matmul %59, %3, %cst_19 {dimension_numbers = #tpu.dot_dimension_numbers<[1], [0], [0], [1], [0, 0, 1, 1], [], []>} : vector<8x32xf32>, vector<32x128xf32>, vector<8x128xf32> -> vector<8x128xf32>
    %65 = arith.addf %63, %64 : vector<8x128xf32>
    %cst_20 = arith.constant 5.000000e-01 : f32
    %66 = vector.broadcast %cst_20 : f32 to vector<8x128xf32>
    %67 = arith.mulf %66, %65 : vector<8x128xf32>
    %68 = arith.select %9, %65, %67 : vector<8x128xi1>, vector<8x128xf32>
    %69 = math.tanh %68 : vector<8x128xf32>
    %cst_21 = arith.constant 5.000000e-01 : f32
    %70 = vector.broadcast %cst_21 : f32 to vector<8x128xf32>
    %71 = arith.mulf %70, %69 : vector<8x128xf32>
    %cst_22 = arith.constant 5.000000e-01 : f32
    %72 = vector.broadcast %cst_22 : f32 to vector<8x128xf32>
    %73 = arith.addf %71, %72 : vector<8x128xf32>
    %74 = arith.select %9, %69, %73 : vector<8x128xi1>, vector<8x128xf32>
    %75 = vector.extract_strided_slice %74 {offsets = [0, 0], sizes = [8, 32], strides = [1, 1]} : vector<8x128xf32> to vector<8x32xf32>
    %76 = vector.extract_strided_slice %74 {offsets = [0, 32], sizes = [8, 32], strides = [1, 1]} : vector<8x128xf32> to vector<8x32xf32>
    %77 = vector.extract_strided_slice %74 {offsets = [0, 64], sizes = [8, 32], strides = [1, 1]} : vector<8x128xf32> to vector<8x32xf32>
    %78 = vector.extract_strided_slice %74 {offsets = [0, 96], sizes = [8, 32], strides = [1, 1]} : vector<8x128xf32> to vector<8x32xf32>
    %79 = arith.mulf %76, %57 : vector<8x32xf32>
    %80 = arith.mulf %75, %77 : vector<8x32xf32>
    %81 = arith.addf %79, %80 : vector<8x32xf32>
    %82 = math.tanh %81 : vector<8x32xf32>
    %83 = arith.mulf %78, %82 : vector<8x32xf32>
    %c3_i32 = arith.constant 3 : i32
    %c8_i32_23 = arith.constant 8 : i32
    %84 = arith.muli %c3_i32, %c8_i32_23 : i32
    %85 = tpu.assume_multiple %84, 8 : i32
    %86 = arith.index_cast %85 : i32 to index
    %c0_24 = arith.constant 0 : index
    %87 = vector.load %arg1[%86, %c0_24] : memref<64x128xf32, #tpu.memory_space<vmem>>, vector<8x128xf32>
    %cst_25 = arith.constant dense<0.000000e+00> : vector<8x128xf32>
    %88 = tpu.matmul %83, %3, %cst_25 {dimension_numbers = #tpu.dot_dimension_numbers<[1], [0], [0], [1], [0, 0, 1, 1], [], []>} : vector<8x32xf32>, vector<32x128xf32>, vector<8x128xf32> -> vector<8x128xf32>
    %89 = arith.addf %87, %88 : vector<8x128xf32>
    %cst_26 = arith.constant 5.000000e-01 : f32
    %90 = vector.broadcast %cst_26 : f32 to vector<8x128xf32>
    %91 = arith.mulf %90, %89 : vector<8x128xf32>
    %92 = arith.select %9, %89, %91 : vector<8x128xi1>, vector<8x128xf32>
    %93 = math.tanh %92 : vector<8x128xf32>
    %cst_27 = arith.constant 5.000000e-01 : f32
    %94 = vector.broadcast %cst_27 : f32 to vector<8x128xf32>
    %95 = arith.mulf %94, %93 : vector<8x128xf32>
    %cst_28 = arith.constant 5.000000e-01 : f32
    %96 = vector.broadcast %cst_28 : f32 to vector<8x128xf32>
    %97 = arith.addf %95, %96 : vector<8x128xf32>
    %98 = arith.select %9, %93, %97 : vector<8x128xi1>, vector<8x128xf32>
    %99 = vector.extract_strided_slice %98 {offsets = [0, 0], sizes = [8, 32], strides = [1, 1]} : vector<8x128xf32> to vector<8x32xf32>
    %100 = vector.extract_strided_slice %98 {offsets = [0, 32], sizes = [8, 32], strides = [1, 1]} : vector<8x128xf32> to vector<8x32xf32>
    %101 = vector.extract_strided_slice %98 {offsets = [0, 64], sizes = [8, 32], strides = [1, 1]} : vector<8x128xf32> to vector<8x32xf32>
    %102 = vector.extract_strided_slice %98 {offsets = [0, 96], sizes = [8, 32], strides = [1, 1]} : vector<8x128xf32> to vector<8x32xf32>
    %103 = arith.mulf %100, %81 : vector<8x32xf32>
    %104 = arith.mulf %99, %101 : vector<8x32xf32>
    %105 = arith.addf %103, %104 : vector<8x32xf32>
    %106 = math.tanh %105 : vector<8x32xf32>
    %107 = arith.mulf %102, %106 : vector<8x32xf32>
    %c4_i32 = arith.constant 4 : i32
    %c8_i32_29 = arith.constant 8 : i32
    %108 = arith.muli %c4_i32, %c8_i32_29 : i32
    %109 = tpu.assume_multiple %108, 8 : i32
    %110 = arith.index_cast %109 : i32 to index
    %c0_30 = arith.constant 0 : index
    %111 = vector.load %arg1[%110, %c0_30] : memref<64x128xf32, #tpu.memory_space<vmem>>, vector<8x128xf32>
    %cst_31 = arith.constant dense<0.000000e+00> : vector<8x128xf32>
    %112 = tpu.matmul %107, %3, %cst_31 {dimension_numbers = #tpu.dot_dimension_numbers<[1], [0], [0], [1], [0, 0, 1, 1], [], []>} : vector<8x32xf32>, vector<32x128xf32>, vector<8x128xf32> -> vector<8x128xf32>
    %113 = arith.addf %111, %112 : vector<8x128xf32>
    %cst_32 = arith.constant 5.000000e-01 : f32
    %114 = vector.broadcast %cst_32 : f32 to vector<8x128xf32>
    %115 = arith.mulf %114, %113 : vector<8x128xf32>
    %116 = arith.select %9, %113, %115 : vector<8x128xi1>, vector<8x128xf32>
    %117 = math.tanh %116 : vector<8x128xf32>
    %cst_33 = arith.constant 5.000000e-01 : f32
    %118 = vector.broadcast %cst_33 : f32 to vector<8x128xf32>
    %119 = arith.mulf %118, %117 : vector<8x128xf32>
    %cst_34 = arith.constant 5.000000e-01 : f32
    %120 = vector.broadcast %cst_34 : f32 to vector<8x128xf32>
    %121 = arith.addf %119, %120 : vector<8x128xf32>
    %122 = arith.select %9, %117, %121 : vector<8x128xi1>, vector<8x128xf32>
    %123 = vector.extract_strided_slice %122 {offsets = [0, 0], sizes = [8, 32], strides = [1, 1]} : vector<8x128xf32> to vector<8x32xf32>
    %124 = vector.extract_strided_slice %122 {offsets = [0, 32], sizes = [8, 32], strides = [1, 1]} : vector<8x128xf32> to vector<8x32xf32>
    %125 = vector.extract_strided_slice %122 {offsets = [0, 64], sizes = [8, 32], strides = [1, 1]} : vector<8x128xf32> to vector<8x32xf32>
    %126 = vector.extract_strided_slice %122 {offsets = [0, 96], sizes = [8, 32], strides = [1, 1]} : vector<8x128xf32> to vector<8x32xf32>
    %127 = arith.mulf %124, %105 : vector<8x32xf32>
    %128 = arith.mulf %123, %125 : vector<8x32xf32>
    %129 = arith.addf %127, %128 : vector<8x32xf32>
    %130 = math.tanh %129 : vector<8x32xf32>
    %131 = arith.mulf %126, %130 : vector<8x32xf32>
    %c5_i32 = arith.constant 5 : i32
    %c8_i32_35 = arith.constant 8 : i32
    %132 = arith.muli %c5_i32, %c8_i32_35 : i32
    %133 = tpu.assume_multiple %132, 8 : i32
    %134 = arith.index_cast %133 : i32 to index
    %c0_36 = arith.constant 0 : index
    %135 = vector.load %arg1[%134, %c0_36] : memref<64x128xf32, #tpu.memory_space<vmem>>, vector<8x128xf32>
    %cst_37 = arith.constant dense<0.000000e+00> : vector<8x128xf32>
    %136 = tpu.matmul %131, %3, %cst_37 {dimension_numbers = #tpu.dot_dimension_numbers<[1], [0], [0], [1], [0, 0, 1, 1], [], []>} : vector<8x32xf32>, vector<32x128xf32>, vector<8x128xf32> -> vector<8x128xf32>
    %137 = arith.addf %135, %136 : vector<8x128xf32>
    %cst_38 = arith.constant 5.000000e-01 : f32
    %138 = vector.broadcast %cst_38 : f32 to vector<8x128xf32>
    %139 = arith.mulf %138, %137 : vector<8x128xf32>
    %140 = arith.select %9, %137, %139 : vector<8x128xi1>, vector<8x128xf32>
    %141 = math.tanh %140 : vector<8x128xf32>
    %cst_39 = arith.constant 5.000000e-01 : f32
    %142 = vector.broadcast %cst_39 : f32 to vector<8x128xf32>
    %143 = arith.mulf %142, %141 : vector<8x128xf32>
    %cst_40 = arith.constant 5.000000e-01 : f32
    %144 = vector.broadcast %cst_40 : f32 to vector<8x128xf32>
    %145 = arith.addf %143, %144 : vector<8x128xf32>
    %146 = arith.select %9, %141, %145 : vector<8x128xi1>, vector<8x128xf32>
    %147 = vector.extract_strided_slice %146 {offsets = [0, 0], sizes = [8, 32], strides = [1, 1]} : vector<8x128xf32> to vector<8x32xf32>
    %148 = vector.extract_strided_slice %146 {offsets = [0, 32], sizes = [8, 32], strides = [1, 1]} : vector<8x128xf32> to vector<8x32xf32>
    %149 = vector.extract_strided_slice %146 {offsets = [0, 64], sizes = [8, 32], strides = [1, 1]} : vector<8x128xf32> to vector<8x32xf32>
    %150 = vector.extract_strided_slice %146 {offsets = [0, 96], sizes = [8, 32], strides = [1, 1]} : vector<8x128xf32> to vector<8x32xf32>
    %151 = arith.mulf %148, %129 : vector<8x32xf32>
    %152 = arith.mulf %147, %149 : vector<8x32xf32>
    %153 = arith.addf %151, %152 : vector<8x32xf32>
    %154 = math.tanh %153 : vector<8x32xf32>
    %155 = arith.mulf %150, %154 : vector<8x32xf32>
    %c6_i32 = arith.constant 6 : i32
    %c8_i32_41 = arith.constant 8 : i32
    %156 = arith.muli %c6_i32, %c8_i32_41 : i32
    %157 = tpu.assume_multiple %156, 8 : i32
    %158 = arith.index_cast %157 : i32 to index
    %c0_42 = arith.constant 0 : index
    %159 = vector.load %arg1[%158, %c0_42] : memref<64x128xf32, #tpu.memory_space<vmem>>, vector<8x128xf32>
    %cst_43 = arith.constant dense<0.000000e+00> : vector<8x128xf32>
    %160 = tpu.matmul %155, %3, %cst_43 {dimension_numbers = #tpu.dot_dimension_numbers<[1], [0], [0], [1], [0, 0, 1, 1], [], []>} : vector<8x32xf32>, vector<32x128xf32>, vector<8x128xf32> -> vector<8x128xf32>
    %161 = arith.addf %159, %160 : vector<8x128xf32>
    %cst_44 = arith.constant 5.000000e-01 : f32
    %162 = vector.broadcast %cst_44 : f32 to vector<8x128xf32>
    %163 = arith.mulf %162, %161 : vector<8x128xf32>
    %164 = arith.select %9, %161, %163 : vector<8x128xi1>, vector<8x128xf32>
    %165 = math.tanh %164 : vector<8x128xf32>
    %cst_45 = arith.constant 5.000000e-01 : f32
    %166 = vector.broadcast %cst_45 : f32 to vector<8x128xf32>
    %167 = arith.mulf %166, %165 : vector<8x128xf32>
    %cst_46 = arith.constant 5.000000e-01 : f32
    %168 = vector.broadcast %cst_46 : f32 to vector<8x128xf32>
    %169 = arith.addf %167, %168 : vector<8x128xf32>
    %170 = arith.select %9, %165, %169 : vector<8x128xi1>, vector<8x128xf32>
    %171 = vector.extract_strided_slice %170 {offsets = [0, 0], sizes = [8, 32], strides = [1, 1]} : vector<8x128xf32> to vector<8x32xf32>
    %172 = vector.extract_strided_slice %170 {offsets = [0, 32], sizes = [8, 32], strides = [1, 1]} : vector<8x128xf32> to vector<8x32xf32>
    %173 = vector.extract_strided_slice %170 {offsets = [0, 64], sizes = [8, 32], strides = [1, 1]} : vector<8x128xf32> to vector<8x32xf32>
    %174 = vector.extract_strided_slice %170 {offsets = [0, 96], sizes = [8, 32], strides = [1, 1]} : vector<8x128xf32> to vector<8x32xf32>
    %175 = arith.mulf %172, %153 : vector<8x32xf32>
    %176 = arith.mulf %171, %173 : vector<8x32xf32>
    %177 = arith.addf %175, %176 : vector<8x32xf32>
    %178 = math.tanh %177 : vector<8x32xf32>
    %179 = arith.mulf %174, %178 : vector<8x32xf32>
    %c7_i32 = arith.constant 7 : i32
    %c8_i32_47 = arith.constant 8 : i32
    %180 = arith.muli %c7_i32, %c8_i32_47 : i32
    %181 = tpu.assume_multiple %180, 8 : i32
    %182 = arith.index_cast %181 : i32 to index
    %c0_48 = arith.constant 0 : index
    %183 = vector.load %arg1[%182, %c0_48] : memref<64x128xf32, #tpu.memory_space<vmem>>, vector<8x128xf32>
    %cst_49 = arith.constant dense<0.000000e+00> : vector<8x128xf32>
    %184 = tpu.matmul %179, %3, %cst_49 {dimension_numbers = #tpu.dot_dimension_numbers<[1], [0], [0], [1], [0, 0, 1, 1], [], []>} : vector<8x32xf32>, vector<32x128xf32>, vector<8x128xf32> -> vector<8x128xf32>
    %185 = arith.addf %183, %184 : vector<8x128xf32>
    %cst_50 = arith.constant 5.000000e-01 : f32
    %186 = vector.broadcast %cst_50 : f32 to vector<8x128xf32>
    %187 = arith.mulf %186, %185 : vector<8x128xf32>
    %188 = arith.select %9, %185, %187 : vector<8x128xi1>, vector<8x128xf32>
    %189 = math.tanh %188 : vector<8x128xf32>
    %cst_51 = arith.constant 5.000000e-01 : f32
    %190 = vector.broadcast %cst_51 : f32 to vector<8x128xf32>
    %191 = arith.mulf %190, %189 : vector<8x128xf32>
    %cst_52 = arith.constant 5.000000e-01 : f32
    %192 = vector.broadcast %cst_52 : f32 to vector<8x128xf32>
    %193 = arith.addf %191, %192 : vector<8x128xf32>
    %194 = arith.select %9, %189, %193 : vector<8x128xi1>, vector<8x128xf32>
    %195 = vector.extract_strided_slice %194 {offsets = [0, 0], sizes = [8, 32], strides = [1, 1]} : vector<8x128xf32> to vector<8x32xf32>
    %196 = vector.extract_strided_slice %194 {offsets = [0, 32], sizes = [8, 32], strides = [1, 1]} : vector<8x128xf32> to vector<8x32xf32>
    %197 = vector.extract_strided_slice %194 {offsets = [0, 64], sizes = [8, 32], strides = [1, 1]} : vector<8x128xf32> to vector<8x32xf32>
    %198 = vector.extract_strided_slice %194 {offsets = [0, 96], sizes = [8, 32], strides = [1, 1]} : vector<8x128xf32> to vector<8x32xf32>
    %199 = arith.mulf %196, %177 : vector<8x32xf32>
    %200 = arith.mulf %195, %197 : vector<8x32xf32>
    %201 = arith.addf %199, %200 : vector<8x32xf32>
    %202 = math.tanh %201 : vector<8x32xf32>
    %203 = arith.mulf %198, %202 : vector<8x32xf32>
    %c8_i32_53 = arith.constant 8 : i32
    %c0_54 = arith.constant 0 : index
    %c0_55 = arith.constant 0 : index
    %204 = vector.load %arg6[%c0_54, %c0_55] : memref<8x32xf32, #tpu.memory_space<vmem>>, vector<8x32xf32>
    tpu.vector_store %arg6[%c0_54, %c0_55], %203 {strides = array<i32>} : memref<8x32xf32, #tpu.memory_space<vmem>>, vector<8x32xf32>,
    %c0_56 = arith.constant 0 : index
    %c0_57 = arith.constant 0 : index
    %205 = vector.load %arg7[%c0_56, %c0_57] : memref<8x32xf32, #tpu.memory_space<vmem>>, vector<8x32xf32>
    tpu.vector_store %arg7[%c0_56, %c0_57], %201 {strides = array<i32>} : memref<8x32xf32, #tpu.memory_space<vmem>>, vector<8x32xf32>,
    %c0_i32_58 = arith.constant 0 : i32
    %206 = arith.cmpi eq, %arg0, %c0_i32_58 : i32
    %207 = arith.extui %206 : i1 to i32
    %c0_i32_59 = arith.constant 0 : i32
    %208 = arith.cmpi ne, %207, %c0_i32_59 : i32
    scf.if %208 {
      %c0_60 = arith.constant 0 : index
      %c0_61 = arith.constant 0 : index
      %209 = vector.load %arg3[%c0_60, %c0_61] : memref<1x32xf32, #tpu.memory_space<vmem>>, vector<1x32xf32>
      %210 = vector.broadcast %209 : vector<1x32xf32> to vector<8x32xf32>
      %211 = arith.mulf %203, %210 : vector<8x32xf32>
      %cst_62 = arith.constant dense<0.000000e+00> : vector<8xf32>
      %212 = vector.multi_reduction <add>, %211, %cst_62 [1] : vector<8x32xf32> to vector<8xf32>
      %213 = vector.shape_cast %212 : vector<8xf32> to vector<8x1xf32>
      %c0_63 = arith.constant 0 : index
      %c0_64 = arith.constant 0 : index
      %214 = vector.load %arg4[%c0_63, %c0_64] : memref<1x1xf32, #tpu.memory_space<vmem>>, vector<1x1xf32>
      %215 = vector.broadcast %214 : vector<1x1xf32> to vector<8x1xf32>
      %216 = arith.addf %213, %215 : vector<8x1xf32>
      %cst_65 = arith.constant 5.000000e-01 : f32
      %217 = vector.broadcast %cst_65 : f32 to vector<8x1xf32>
      %218 = arith.mulf %217, %216 : vector<8x1xf32>
      %219 = math.tanh %218 : vector<8x1xf32>
      %cst_66 = arith.constant 5.000000e-01 : f32
      %220 = vector.broadcast %cst_66 : f32 to vector<8x1xf32>
      %221 = arith.mulf %220, %219 : vector<8x1xf32>
      %cst_67 = arith.constant 5.000000e-01 : f32
      %222 = vector.broadcast %cst_67 : f32 to vector<8x1xf32>
      %223 = arith.addf %221, %222 : vector<8x1xf32>
      %c0_68 = arith.constant 0 : index
      %c0_69 = arith.constant 0 : index
      %224 = vector.load %arg5[%c0_68, %c0_69] : memref<8x1xf32, #tpu.memory_space<vmem>>, vector<8x1xf32>
      tpu.vector_store %arg5[%c0_68, %c0_69], %223 {strides = array<i32>} : memref<8x1xf32, #tpu.memory_space<vmem>>, vector<8x1xf32>,
    } else {
    }
    return
  }
  func.func @transform_0(%arg0: i32) -> (i32, i32) {
    %c0_i32 = arith.constant 0 : i32
    %c0_i32_0 = arith.constant 0 : i32
    return %arg0, %c0_i32 : i32, i32
  }
  func.func @transform_1(%arg0: i32) -> (i32, i32) {
    %c0_i32 = arith.constant 0 : i32
    %c0_i32_0 = arith.constant 0 : i32
    %c0_i32_1 = arith.constant 0 : i32
    return %c0_i32, %c0_i32_0 : i32, i32
  }
  func.func @transform_2(%arg0: i32) -> (i32, i32) {
    %c0_i32 = arith.constant 0 : i32
    %c0_i32_0 = arith.constant 0 : i32
    %c0_i32_1 = arith.constant 0 : i32
    return %c0_i32, %c0_i32_0 : i32, i32
  }
  func.func @transform_3(%arg0: i32) -> (i32, i32) {
    %c0_i32 = arith.constant 0 : i32
    %c0_i32_0 = arith.constant 0 : i32
    %c0_i32_1 = arith.constant 0 : i32
    return %c0_i32, %c0_i32_0 : i32, i32
  }
  func.func @transform_4(%arg0: i32) -> (i32, i32) {
    %c0_i32 = arith.constant 0 : i32
    %c0_i32_0 = arith.constant 0 : i32
    %c0_i32_1 = arith.constant 0 : i32
    return %c0_i32, %c0_i32_0 : i32, i32
  }
}

</mosaic_0001>

<llo_original>
// kernel: tpu_custom_call.1
$region0: #{tpu_custom_call.1}
  #allocation0 [shape = 'u32[]', space=smem, size = 0x4, offset = 0x4, fixed_abs, tag = 'smem constant byte address 0x4 - core index']
  #allocation1 [shape = 'u32[72,128]{1,0:T(1,128)}', space=vmem, size = 0x9000, scoped, tag = 'internal scratch']
  #allocation2 [shape = 'f32[8,32]{1,0:T(8,128)}', space=vmem, size = 0x1000, scoped, tag = 'scratch operand']
  #allocation3 [shape = 'f32[8,32]{1,0:T(8,128)}', space=vmem, size = 0x1000, scoped, tag = 'scratch operand']
  #allocation4 [shape = 'f32[1,1]{1,0:T(1,128)S(1)}', space=vmem, size = 0x200, scoped, tag = 'scoped memory for tpu_custom_call.1']
  %s0 = inlined_call_operand.hbm [shape: f32[64,128], index: 0, kind: input, shape index: {}]
  %s1 = inlined_call_operand.hbm [shape: f32[32,128], index: 1, kind: input, shape index: {}]
  %s2 = inlined_call_operand.vmem [shape: f32[1,32], index: 2, kind: input, shape index: {}]
  %s3 = inlined_call_operand.<no memory space> [shape: f32[1,1], index: 3, kind: input, shape index: {}]
  %s4 = inlined_call_operand.vmem [shape: f32[8,1], index: 4, kind: output, shape index: {}]
  %s5 = sld [smem:[#allocation0]]
  $region42: #{tpu_custom_call.1} parent=0
    _
  %s7 = ssub.s32 1, %s5
  %s8 = scalar_select 0, %s7, %s5
  %v9 = vstv %s3
  %10 = vst [vmem:[#allocation4] sm:$0x1] %v9
  $region1: #{tpu_custom_call.1} parent=0
    #allocation5 [shape = 'u8[32768]{0}', space=vmem, size = 0x8000, scoped, tag = 'input window, operand 0, single buffered']
    #allocation6 [shape = 's32[1]{0}', space=sflag, size = 0x4, scoped, tag = 'scoped memory for tpu_custom_call.1']
    #allocation7 [shape = 'u8[16384]{0}', space=vmem, size = 0x4000, scoped, tag = 'input window, operand 1, single buffered']
    #allocation8 [shape = 's32[1]{0}', space=sflag, size = 0x4, scoped, tag = 'scoped memory for tpu_custom_call.1']
    %11 = vsyncpa [#allocation6], 0
    %12 = vsyncpa [#allocation8], 0
    // Predicated region
    $region2: #{tpu_custom_call.1} parent=1 // pred_check
      _
    $region3: #{tpu_custom_call.1} parent=1 // pred_check_branch
      %14 = sbr.rel (0) target = $region5
    $region4: #{tpu_custom_call.1} parent=1 // pred_region
      %16 = vsyncadd [#allocation6], 0
      %s17 = sshll.u32 %s0, 4
      %s18 = int_to_ptr.hbm [resolvable:$true] %s17
      %s19 = sshll.u32 [#allocation5], 4
      %s20 = int_to_ptr.vmem [resolvable:$true] %s19
      %25 = dma.hbm_to_vmem [thread:$0]  %s18, 1024, %s20, [#allocation6], 128, 128, 8
    $region5: #{tpu_custom_call.1} parent=1 // pred_fallthru
      _
    // Predicated region
    $region6: #{tpu_custom_call.1} parent=1 // pred_check
      _
    $region7: #{tpu_custom_call.1} parent=1 // pred_check_branch
      %27 = sbr.rel (0) target = $region9
    $region8: #{tpu_custom_call.1} parent=1 // pred_region
      %29 = vsyncadd [#allocation8], 0
      %s30 = sshll.u32 %s1, 4
      %s31 = int_to_ptr.hbm [resolvable:$true] %s30
      %s32 = sshll.u32 [#allocation7], 4
      %s33 = int_to_ptr.vmem [resolvable:$true] %s32
      %38 = dma.hbm_to_vmem [thread:$0]  %s31, 512, %s33, [#allocation8], 128, 128, 8
    $region9: #{tpu_custom_call.1} parent=1 // pred_fallthru
      _
    // Predicated region
    $region10: #{tpu_custom_call.1} parent=1 // pred_check
      _
    $region11: #{tpu_custom_call.1} parent=1 // pred_check_branch
      %40 = sbr.rel (0) target = $region13
    $region12: #{tpu_custom_call.1} parent=1 // pred_region
      _
    $region13: #{tpu_custom_call.1} parent=1 // pred_fallthru
      _
    // Predicated region
    $region14: #{tpu_custom_call.1} parent=1 // pred_check
      _
    $region15: #{tpu_custom_call.1} parent=1 // pred_check_branch
      %42 = sbr.rel (0) target = $region17
    $region16: #{tpu_custom_call.1} parent=1 // pred_region
      _
    $region17: #{tpu_custom_call.1} parent=1 // pred_fallthru
      _
    // Predicated region
    $region18: #{tpu_custom_call.1} parent=1 // pred_check
      _
    $region19: #{tpu_custom_call.1} parent=1 // pred_check_branch
      %44 = sbr.rel (0) target = $region21
    $region20: #{tpu_custom_call.1} parent=1 // pred_region
      %46 = dma.done [#allocation6], 1024
    $region21: #{tpu_custom_call.1} parent=1 // pred_fallthru
      _
    // Predicated region
    $region22: #{tpu_custom_call.1} parent=1 // pred_check
      _
    $region23: #{tpu_custom_call.1} parent=1 // pred_check_branch
      %48 = sbr.rel (0) target = $region25
    $region24: #{tpu_custom_call.1} parent=1 // pred_region
      %50 = dma.done [#allocation8], 512
    $region25: #{tpu_custom_call.1} parent=1 // pred_fallthru
      _
    %p51 = scmp.eq.s32.totalorder 0, 0
    // Predicated region
    $region26: #{tpu_custom_call.1} parent=1 // pred_check
      %p52 = pneg %p51
    $region27: #{tpu_custom_call.1} parent=1 // pred_check_branch
      %54 = sbr.rel (%p52) target = $region29
    $region28: #{tpu_custom_call.1} parent=1 // pred_region
      %vm55 = vcmask 261120
      %56 = vst.msk [vmem:[#allocation2] sm:$0xff] %vm55, 0.0
      %57 = vst.msk [vmem:[#allocation3] sm:$0xff] %vm55, 0.0
    $region29: #{tpu_custom_call.1} parent=1 // pred_fallthru
      _
    %v58 = vld [vmem:[#allocation7] sm:$0xff]
    %v59 = vld [vmem:[#allocation7 + $0x8] sm:$0xff]
    %v60 = vld [vmem:[#allocation7 + $0x10] sm:$0xff]
    %v61 = vld [vmem:[#allocation7 + $0x18] sm:$0xff]
    %v62 = vlaneseq
    %v63 = vand.u32 %v62, 127
    %vm64 = vcmp.ge.s32.totalorder %v63, 64
    %vm65 = vcmp.lt.s32.totalorder %v63, 96
    %vm66 = vmand %vm64, %vm65
    %v67 = vld [vmem:[#allocation2] sm:$0xff]
    %v68 = vld [vmem:[#allocation3] sm:$0xff]
    %v69 = vld [vmem:[#allocation5] sm:$0xff]
    %vm70 = vcmask 261120
    %v72 = vsel %vm70, %v67, 0
    %74 = vmatpush.msra.mxu0 0.0
    %75 = vmatpush.msra.mxu0 0.0
    %76 = vmatpush.msra.mxu0 0.0
    %77 = vmatpush.msra.mxu0 0.0
    %78 = vmatpush.msra.mxu0 0.0
    %79 = vmatpush.msra.mxu0 0.0
    %80 = vmatpush.msra.mxu0 0.0
    %81 = vmatpush.msra.mxu0 0.0
    %82 = vmatpush.msra.mxu0 0.0
    %83 = vmatpush.msra.mxu0 0.0
    %84 = vmatpush.msra.mxu0 0.0
    %85 = vmatpush.msra.mxu0 0.0
    %86 = vmatpush.msra.mxu0 %v61
    %87 = vmatpush.msra.mxu0 %v60
    %88 = vmatpush.msra.mxu0 %v59
    %89 = vmatpush.msra.mxu0 %v58
    %90 = vmatmul.f32.gmra.mxu0 %v72
    %v91 = vpop.f32.mrf.mxu0
    %v92 = vadd.f32 0.0, %v91
    %93 = vdwg.mxu0
    %v94 = vadd.f32 %v69, %v92
    %v95 = vmul.f32 %v94, 0.5
    %v96 = vsel %vm66, %v94, %v95
    %v97 = vtanh.pop %v96
    %v98 = vmul.f32 %v97, 0.5
    %v99 = vadd.f32 %v98, 0.5
    %v100 = vsel %vm66, %v97, %v99
    %102 = vrot.lane.b32.xlu0 %v68, 32
    %v103 = vpop.permute.xlu0 %102
    %v105 = vmul.f32 %v100, %v103
    %107 = vrot.lane.b32.xlu0 %v100, 64
    %v108 = vpop.permute.xlu0 %107
    %v110 = vmul.f32 %v100, %v108
    %112 = vrot.lane.b32.xlu0 %v110, 32
    %v113 = vpop.permute.xlu0 %112
    %v115 = vadd.f32 %v105, %v113
    %v116 = vtanh.pop %v115
    %118 = vrot.lane.b32.xlu0 %v116, 64
    %v119 = vpop.permute.xlu0 %118
    %v121 = vmul.f32 %v100, %v119
    %s122 = scalar_lea.vmem [#allocation5], 8
    %v123 = vld [vmem:[%s122] sm:$0xff]
    %125 = vrot.lane.b32.xlu0 %v121, 32
    %v126 = vpop.permute.xlu0 %125
    %v127 = vsel %vm70, %v126, 0
    %129 = vmatpush.msra.mxu0 0.0
    %130 = vmatpush.msra.mxu0 0.0
    %131 = vmatpush.msra.mxu0 0.0
    %132 = vmatpush.msra.mxu0 0.0
    %133 = vmatpush.msra.mxu0 0.0
    %134 = vmatpush.msra.mxu0 0.0
    %135 = vmatpush.msra.mxu0 0.0
    %136 = vmatpush.msra.mxu0 0.0
    %137 = vmatpush.msra.mxu0 0.0
    %138 = vmatpush.msra.mxu0 0.0
    %139 = vmatpush.msra.mxu0 0.0
    %140 = vmatpush.msra.mxu0 0.0
    %141 = vmatpush.msra.mxu0 %v61
    %142 = vmatpush.msra.mxu0 %v60
    %143 = vmatpush.msra.mxu0 %v59
    %144 = vmatpush.msra.mxu0 %v58
    %145 = vmatmul.f32.gmra.mxu0 %v127
    %v146 = vpop.f32.mrf.mxu0
    %v147 = vadd.f32 0.0, %v146
    %148 = vdwg.mxu0
    %v149 = vadd.f32 %v123, %v147
    %v150 = vmul.f32 %v149, 0.5
    %v151 = vsel %vm66, %v149, %v150
    %v152 = vtanh.pop %v151
    %v153 = vmul.f32 %v152, 0.5
    %v154 = vadd.f32 %v153, 0.5
    %v155 = vsel %vm66, %v152, %v154
    %v156 = vmul.f32 %v155, %v115
    %158 = vrot.lane.b32.xlu0 %v155, 64
    %v159 = vpop.permute.xlu0 %158
    %v161 = vmul.f32 %v155, %v159
    %163 = vrot.lane.b32.xlu0 %v161, 32
    %v164 = vpop.permute.xlu0 %163
    %v166 = vadd.f32 %v156, %v164
    %v167 = vtanh.pop %v166
    %169 = vrot.lane.b32.xlu0 %v167, 64
    %v170 = vpop.permute.xlu0 %169
    %v172 = vmul.f32 %v155, %v170
    %s173 = scalar_lea.vmem [#allocation5], 16
    %v174 = vld [vmem:[%s173] sm:$0xff]
    %176 = vrot.lane.b32.xlu0 %v172, 32
    %v177 = vpop.permute.xlu0 %176
    %v178 = vsel %vm70, %v177, 0
    %180 = vmatpush.msra.mxu0 0.0
    %181 = vmatpush.msra.mxu0 0.0
    %182 = vmatpush.msra.mxu0 0.0
    %183 = vmatpush.msra.mxu0 0.0
    %184 = vmatpush.msra.mxu0 0.0
    %185 = vmatpush.msra.mxu0 0.0
    %186 = vmatpush.msra.mxu0 0.0
    %187 = vmatpush.msra.mxu0 0.0
    %188 = vmatpush.msra.mxu0 0.0
    %189 = vmatpush.msra.mxu0 0.0
    %190 = vmatpush.msra.mxu0 0.0
    %191 = vmatpush.msra.mxu0 0.0
    %192 = vmatpush.msra.mxu0 %v61
    %193 = vmatpush.msra.mxu0 %v60
    %194 = vmatpush.msra.mxu0 %v59
    %195 = vmatpush.msra.mxu0 %v58
    %196 = vmatmul.f32.gmra.mxu0 %v178
    %v197 = vpop.f32.mrf.mxu0
    %v198 = vadd.f32 0.0, %v197
    %199 = vdwg.mxu0
    %v200 = vadd.f32 %v174, %v198
    %v201 = vmul.f32 %v200, 0.5
    %v202 = vsel %vm66, %v200, %v201
    %v203 = vtanh.pop %v202
    %v204 = vmul.f32 %v203, 0.5
    %v205 = vadd.f32 %v204, 0.5
    %v206 = vsel %vm66, %v203, %v205
    %v207 = vmul.f32 %v206, %v166
    %209 = vrot.lane.b32.xlu0 %v206, 64
    %v210 = vpop.permute.xlu0 %209
    %v212 = vmul.f32 %v206, %v210
    %214 = vrot.lane.b32.xlu0 %v212, 32
    %v215 = vpop.permute.xlu0 %214
    %v217 = vadd.f32 %v207, %v215
    %v218 = vtanh.pop %v217
    %220 = vrot.lane.b32.xlu0 %v218, 64
    %v221 = vpop.permute.xlu0 %220
    %v223 = vmul.f32 %v206, %v221
    %s224 = scalar_lea.vmem [#allocation5], 24
    %v225 = vld [vmem:[%s224] sm:$0xff]
    %227 = vrot.lane.b32.xlu0 %v223, 32
    %v228 = vpop.permute.xlu0 %227
    %v229 = vsel %vm70, %v228, 0
    %231 = vmatpush.msra.mxu0 0.0
    %232 = vmatpush.msra.mxu0 0.0
    %233 = vmatpush.msra.mxu0 0.0
    %234 = vmatpush.msra.mxu0 0.0
    %235 = vmatpush.msra.mxu0 0.0
    %236 = vmatpush.msra.mxu0 0.0
    %237 = vmatpush.msra.mxu0 0.0
    %238 = vmatpush.msra.mxu0 0.0
    %239 = vmatpush.msra.mxu0 0.0
    %240 = vmatpush.msra.mxu0 0.0
    %241 = vmatpush.msra.mxu0 0.0
    %242 = vmatpush.msra.mxu0 0.0
    %243 = vmatpush.msra.mxu0 %v61
    %244 = vmatpush.msra.mxu0 %v60
    %245 = vmatpush.msra.mxu0 %v59
    %246 = vmatpush.msra.mxu0 %v58
    %247 = vmatmul.f32.gmra.mxu0 %v229
    %v248 = vpop.f32.mrf.mxu0
    %v249 = vadd.f32 0.0, %v248
    %250 = vdwg.mxu0
    %v251 = vadd.f32 %v225, %v249
    %v252 = vmul.f32 %v251, 0.5
    %v253 = vsel %vm66, %v251, %v252
    %v254 = vtanh.pop %v253
    %v255 = vmul.f32 %v254, 0.5
    %v256 = vadd.f32 %v255, 0.5
    %v257 = vsel %vm66, %v254, %v256
    %v258 = vmul.f32 %v257, %v217
    %260 = vrot.lane.b32.xlu0 %v257, 64
    %v261 = vpop.permute.xlu0 %260
    %v263 = vmul.f32 %v257, %v261
    %265 = vrot.lane.b32.xlu0 %v263, 32
    %v266 = vpop.permute.xlu0 %265
    %v268 = vadd.f32 %v258, %v266
    %v269 = vtanh.pop %v268
    %271 = vrot.lane.b32.xlu0 %v269, 64
    %v272 = vpop.permute.xlu0 %271
    %v274 = vmul.f32 %v257, %v272
    %s275 = scalar_lea.vmem [#allocation5], 32
    %v276 = vld [vmem:[%s275] sm:$0xff]
    %278 = vrot.lane.b32.xlu0 %v274, 32
    %v279 = vpop.permute.xlu0 %278
    %v280 = vsel %vm70, %v279, 0
    %282 = vmatpush.msra.mxu0 0.0
    %283 = vmatpush.msra.mxu0 0.0
    %284 = vmatpush.msra.mxu0 0.0
    %285 = vmatpush.msra.mxu0 0.0
    %286 = vmatpush.msra.mxu0 0.0
    %287 = vmatpush.msra.mxu0 0.0
    %288 = vmatpush.msra.mxu0 0.0
    %289 = vmatpush.msra.mxu0 0.0
    %290 = vmatpush.msra.mxu0 0.0
    %291 = vmatpush.msra.mxu0 0.0
    %292 = vmatpush.msra.mxu0 0.0
    %293 = vmatpush.msra.mxu0 0.0
    %294 = vmatpush.msra.mxu0 %v61
    %295 = vmatpush.msra.mxu0 %v60
    %296 = vmatpush.msra.mxu0 %v59
    %297 = vmatpush.msra.mxu0 %v58
    %298 = vmatmul.f32.gmra.mxu0 %v280
    %v299 = vpop.f32.mrf.mxu0
    %v300 = vadd.f32 0.0, %v299
    %301 = vdwg.mxu0
    %v302 = vadd.f32 %v276, %v300
    %v303 = vmul.f32 %v302, 0.5
    %v304 = vsel %vm66, %v302, %v303
    %v305 = vtanh.pop %v304
    %v306 = vmul.f32 %v305, 0.5
    %v307 = vadd.f32 %v306, 0.5
    %v308 = vsel %vm66, %v305, %v307
    %v309 = vmul.f32 %v308, %v268
    %311 = vrot.lane.b32.xlu0 %v308, 64
    %v312 = vpop.permute.xlu0 %311
    %v314 = vmul.f32 %v308, %v312
    %316 = vrot.lane.b32.xlu0 %v314, 32
    %v317 = vpop.permute.xlu0 %316
    %v319 = vadd.f32 %v309, %v317
    %v320 = vtanh.pop %v319
    %322 = vrot.lane.b32.xlu0 %v320, 64
    %v323 = vpop.permute.xlu0 %322
    %v325 = vmul.f32 %v308, %v323
    %s326 = scalar_lea.vmem [#allocation5], 40
    %v327 = vld [vmem:[%s326] sm:$0xff]
    %329 = vrot.lane.b32.xlu0 %v325, 32
    %v330 = vpop.permute.xlu0 %329
    %v331 = vsel %vm70, %v330, 0
    %333 = vmatpush.msra.mxu0 0.0
    %334 = vmatpush.msra.mxu0 0.0
    %335 = vmatpush.msra.mxu0 0.0
    %336 = vmatpush.msra.mxu0 0.0
    %337 = vmatpush.msra.mxu0 0.0
    %338 = vmatpush.msra.mxu0 0.0
    %339 = vmatpush.msra.mxu0 0.0
    %340 = vmatpush.msra.mxu0 0.0
    %341 = vmatpush.msra.mxu0 0.0
    %342 = vmatpush.msra.mxu0 0.0
    %343 = vmatpush.msra.mxu0 0.0
    %344 = vmatpush.msra.mxu0 0.0
    %345 = vmatpush.msra.mxu0 %v61
    %346 = vmatpush.msra.mxu0 %v60
    %347 = vmatpush.msra.mxu0 %v59
    %348 = vmatpush.msra.mxu0 %v58
    %349 = vmatmul.f32.gmra.mxu0 %v331
    %v350 = vpop.f32.mrf.mxu0
    %v351 = vadd.f32 0.0, %v350
    %352 = vdwg.mxu0
    %v353 = vadd.f32 %v327, %v351
    %v354 = vmul.f32 %v353, 0.5
    %v355 = vsel %vm66, %v353, %v354
    %v356 = vtanh.pop %v355
    %v357 = vmul.f32 %v356, 0.5
    %v358 = vadd.f32 %v357, 0.5
    %v359 = vsel %vm66, %v356, %v358
    %v360 = vmul.f32 %v359, %v319
    %362 = vrot.lane.b32.xlu0 %v359, 64
    %v363 = vpop.permute.xlu0 %362
    %v365 = vmul.f32 %v359, %v363
    %367 = vrot.lane.b32.xlu0 %v365, 32
    %v368 = vpop.permute.xlu0 %367
    %v370 = vadd.f32 %v360, %v368
    %v371 = vtanh.pop %v370
    %373 = vrot.lane.b32.xlu0 %v371, 64
    %v374 = vpop.permute.xlu0 %373
    %v376 = vmul.f32 %v359, %v374
    %s377 = scalar_lea.vmem [#allocation5], 48
    %v378 = vld [vmem:[%s377] sm:$0xff]
    %380 = vrot.lane.b32.xlu0 %v376, 32
    %v381 = vpop.permute.xlu0 %380
    %v382 = vsel %vm70, %v381, 0
    %384 = vmatpush.msra.mxu0 0.0
    %385 = vmatpush.msra.mxu0 0.0
    %386 = vmatpush.msra.mxu0 0.0
    %387 = vmatpush.msra.mxu0 0.0
    %388 = vmatpush.msra.mxu0 0.0
    %389 = vmatpush.msra.mxu0 0.0
    %390 = vmatpush.msra.mxu0 0.0
    %391 = vmatpush.msra.mxu0 0.0
    %392 = vmatpush.msra.mxu0 0.0
    %393 = vmatpush.msra.mxu0 0.0
    %394 = vmatpush.msra.mxu0 0.0
    %395 = vmatpush.msra.mxu0 0.0
    %396 = vmatpush.msra.mxu0 %v61
    %397 = vmatpush.msra.mxu0 %v60
    %398 = vmatpush.msra.mxu0 %v59
    %399 = vmatpush.msra.mxu0 %v58
    %400 = vmatmul.f32.gmra.mxu0 %v382
    %v401 = vpop.f32.mrf.mxu0
    %v402 = vadd.f32 0.0, %v401
    %403 = vdwg.mxu0
    %v404 = vadd.f32 %v378, %v402
    %v405 = vmul.f32 %v404, 0.5
    %v406 = vsel %vm66, %v404, %v405
    %v407 = vtanh.pop %v406
    %v408 = vmul.f32 %v407, 0.5
    %v409 = vadd.f32 %v408, 0.5
    %v410 = vsel %vm66, %v407, %v409
    %v411 = vmul.f32 %v410, %v370
    %413 = vrot.lane.b32.xlu0 %v410, 64
    %v414 = vpop.permute.xlu0 %413
    %v416 = vmul.f32 %v410, %v414
    %418 = vrot.lane.b32.xlu0 %v416, 32
    %v419 = vpop.permute.xlu0 %418
    %v421 = vadd.f32 %v411, %v419
    %v422 = vtanh.pop %v421
    %424 = vrot.lane.b32.xlu0 %v422, 64
    %v425 = vpop.permute.xlu0 %424
    %v427 = vmul.f32 %v410, %v425
    %s428 = scalar_lea.vmem [#allocation5], 56
    %v429 = vld [vmem:[%s428] sm:$0xff]
    %431 = vrot.lane.b32.xlu0 %v427, 32
    %v432 = vpop.permute.xlu0 %431
    %v433 = vsel %vm70, %v432, 0
    %435 = vmatpush.msra.mxu0 0.0
    %436 = vmatpush.msra.mxu0 0.0
    %437 = vmatpush.msra.mxu0 0.0
    %438 = vmatpush.msra.mxu0 0.0
    %439 = vmatpush.msra.mxu0 0.0
    %440 = vmatpush.msra.mxu0 0.0
    %441 = vmatpush.msra.mxu0 0.0
    %442 = vmatpush.msra.mxu0 0.0
    %443 = vmatpush.msra.mxu0 0.0
    %444 = vmatpush.msra.mxu0 0.0
    %445 = vmatpush.msra.mxu0 0.0
    %446 = vmatpush.msra.mxu0 0.0
    %447 = vmatpush.msra.mxu0 %v61
    %448 = vmatpush.msra.mxu0 %v60
    %449 = vmatpush.msra.mxu0 %v59
    %450 = vmatpush.msra.mxu0 %v58
    %451 = vmatmul.f32.gmra.mxu0 %v433
    %v452 = vpop.f32.mrf.mxu0
    %v453 = vadd.f32 0.0, %v452
    %454 = vdwg.mxu0
    %v455 = vadd.f32 %v429, %v453
    %v456 = vmul.f32 %v455, 0.5
    %v457 = vsel %vm66, %v455, %v456
    %v458 = vtanh.pop %v457
    %v459 = vmul.f32 %v458, 0.5
    %v460 = vadd.f32 %v459, 0.5
    %v461 = vsel %vm66, %v458, %v460
    %v462 = vmul.f32 %v461, %v421
    %464 = vrot.lane.b32.xlu0 %v461, 64
    %v465 = vpop.permute.xlu0 %464
    %v467 = vmul.f32 %v461, %v465
    %469 = vrot.lane.b32.xlu0 %v467, 32
    %v470 = vpop.permute.xlu0 %469
    %v472 = vadd.f32 %v462, %v470
    %v473 = vtanh.pop %v472
    %475 = vrot.lane.b32.xlu0 %v473, 64
    %v476 = vpop.permute.xlu0 %475
    %v478 = vmul.f32 %v461, %v476
    %480 = vrot.lane.b32.xlu0 %v478, 32
    %v481 = vpop.permute.xlu0 %480
    %483 = vst.msk [vmem:[#allocation2] sm:$0xff] %vm70, %v481
    %485 = vrot.lane.b32.xlu0 %v472, 96
    %v486 = vpop.permute.xlu0 %485
    %488 = vst.msk [vmem:[#allocation3] sm:$0xff] %vm70, %v486
    // Predicated region
    $region30: #{tpu_custom_call.1} parent=1 // pred_check
      %p489 = pneg %p51
    $region31: #{tpu_custom_call.1} parent=1 // pred_check_branch
      %491 = sbr.rel (%p489) target = $region33
    $region32: #{tpu_custom_call.1} parent=1 // pred_region
      %v492 = vld [vmem:[%s2] sm:$0x1]
      %v494 = vperm.slane %v492, 0
      %495 = vrot.lane.b32.xlu0 %v494, 96
      %v496 = vpop.permute.xlu0 %495
      %v498 = vmul.f32 %v478, %v496
      %500 = vrot.lane.b32.xlu0 %v498, 32
      %v501 = vpop.permute.xlu0 %500
      %v503 = vsel %vm70, %v501, 0.0
      %504 = vadd.xlane.f32.xlu0 %v503
      %v505 = vpop.xlane.xlu0 %504
      %v506 = vld [vmem:[#allocation4] sm:$0x1]
      %v508 = vperm.slane %v506, 0
      %v510 = vadd.f32 %v505, %v508
      %v511 = vmul.f32 %v510, 0.5
      %v512 = vtanh.pop %v511
      %v513 = vmul.f32 %v512, 0.5
      %v514 = vadd.f32 %v513, 0.5
      %vm515 = vcmask 7168
      %516 = vst.msk [vmem:[%s4] sm:$0xff] %vm515, %v514
    $region33: #{tpu_custom_call.1} parent=1 // pred_fallthru
      _
    // Predicated region
    $region34: #{tpu_custom_call.1} parent=1 // pred_check
      _
    $region35: #{tpu_custom_call.1} parent=1 // pred_check_branch
      %518 = sbr.rel (0) target = $region37
    $region36: #{tpu_custom_call.1} parent=1 // pred_region
      _
    $region37: #{tpu_custom_call.1} parent=1 // pred_fallthru
      _
    // Predicated region
    $region38: #{tpu_custom_call.1} parent=1 // pred_check
      _
    $region39: #{tpu_custom_call.1} parent=1 // pred_check_branch
      %520 = sbr.rel (0) target = $region41
    $region40: #{tpu_custom_call.1} parent=1 // pred_region
      _
    $region41: #{tpu_custom_call.1} parent=1 // pred_fallthru
      _
    %521 = vsyncpa [#allocation6], 1
    %522 = vsyncpa [#allocation8], 1

</llo_original>
